<compile_context>
chip_gen: v5e
topology: v5e:2x2
jax: 0.10.0
libtpu: 0.0.40
codegen_flags: <defaults>
</compile_context>

<pallas_src>
import functools

import jax
import jax.numpy as jnp
from jax.experimental import pallas as pl
from jax.experimental.pallas import tpu as pltpu


def _pick_tile(dim, cap, align):
    """Largest multiple of `align` (<= cap) dividing `dim`; else the full dim.

    A full-extent block is always legal w.r.t. the (8,128) rule, so the fallback is
    safe; at this module's sizes every dim fits a single block anyway.
    """
    if dim <= cap:
        return dim
    t = (cap // align) * align
    while t >= align:
        if dim % t == 0:
            return t
        t -= align
    return dim


# -----------------------------------------------------------------------------
# Fused  relu?((W @ X) * bn_scale + bn_shift)  kernels (per-batch matmul, NCHW)
# -----------------------------------------------------------------------------
def _fused_kernel_1pass(w_ref, x_ref, scale_ref, shift_ref, o_ref, *, apply_relu):
    # Whole contraction in one K block: no init/finalize, no accumulator scratch.
    acc = jnp.dot(w_ref[...], x_ref[...].astype(jnp.bfloat16),
                  preferred_element_type=jnp.float32)
    out = acc * scale_ref[...] + shift_ref[...]
    if apply_relu:
        out = jnp.maximum(out, 0.0)
    o_ref[...] = out.astype(o_ref.dtype)


def _fused_kernel_kacc(w_ref, x_ref, scale_ref, shift_ref, o_ref, *, apply_relu):
    # Multi-K path: accumulate directly into the (f32) output block, which stays
    # resident across the trailing "arbitrary" grid axis; epilogue on the last step.
    k = pl.program_id(3)

    @pl.when(k == 0)
    def _():
        o_ref[...] = jnp.zeros_like(o_ref)

    o_ref[...] += jnp.dot(w_ref[...], x_ref[...].astype(jnp.bfloat16),
                          preferred_element_type=jnp.float32)

    @pl.when(k == pl.num_programs(3) - 1)
    def _():
        out = o_ref[...] * scale_ref[...] + shift_ref[...]
        if apply_relu:
            out = jnp.maximum(out, 0.0)
        o_ref[...] = out


def fused_conv1x1_bn(x, w_mat, scale, shift, *, apply_relu, out_dtype=jnp.float32):
    """relu?((w_mat @ x[b]) * scale + shift) for every batch b.

    x:      (B, Cin, HW)  f32 or bf16 (cast to bf16 in-kernel for the MXU)
    w_mat:  (Cout, Cin)   bf16 (pre-cast once at prepare time)
    scale:  (Cout, 1)     f32 folded BN scale
    shift:  (Cout, 1)     f32 folded BN shift (+ scale * conv bias)
    returns (B, Cout, HW) out_dtype
    """
    b, cin, hw = x.shape
    cout, cin2 = w_mat.shape
    assert cin == cin2 and scale.shape == (cout, 1) and shift.shape == (cout, 1)

    # Lane-dense tiles; full extents at the default shapes (Cout=256, HW=256, Cin<=256)
    # so the grid collapses to (B, 1, 1) with a single K pass.  K/N alignment prefers
    # 256 (v6e/v7x MXU depth); 128-multiples already satisfy v5e.
    tm = _pick_tile(cout, cap=512, align=256 if cout % 256 == 0 else 8)
    tn = _pick_tile(hw, cap=512, align=128)
    tk = _pick_tile(cin, cap=1024, align=256 if cin % 256 == 0 else 128)
    nk = cin // tk

    if nk > 1:
        out_dtype = jnp.float32   # multi-K accumulation lives in the output block

    out_itemsize = jnp.finfo(out_dtype).bits // 8
    cost = pl.CostEstimate(
        flops=2 * b * cout * hw * cin,
        transcendentals=0,
        bytes_accessed=(x.size * x.dtype.itemsize + w_mat.size * 2
                        + b * cout * hw * out_itemsize))

    if nk == 1:
        grid = (b, cout // tm, hw // tn)
        kernel = functools.partial(_fused_kernel_1pass, apply_relu=apply_relu)
        in_specs = [
            pl.BlockSpec((tm, tk), lambda bb, i, j: (i, 0)),
            pl.BlockSpec((None, tk, tn), lambda bb, i, j: (bb, 0, j)),
            pl.BlockSpec((tm, 1), lambda bb, i, j: (i, 0)),
            pl.BlockSpec((tm, 1), lambda bb, i, j: (i, 0)),
        ]
        out_spec = pl.BlockSpec((None, tm, tn), lambda bb, i, j: (bb, i, j))
        semantics = ("parallel", "parallel", "parallel")
    else:
        grid = (b, cout // tm, hw // tn, nk)
        kernel = functools.partial(_fused_kernel_kacc, apply_relu=apply_relu)
        in_specs = [
            pl.BlockSpec((tm, tk), lambda bb, i, j, kk: (i, kk)),
            pl.BlockSpec((None, tk, tn), lambda bb, i, j, kk: (bb, kk, j)),
            pl.BlockSpec((tm, 1), lambda bb, i, j, kk: (i, 0)),
            pl.BlockSpec((tm, 1), lambda bb, i, j, kk: (i, 0)),
        ]
        out_spec = pl.BlockSpec((None, tm, tn), lambda bb, i, j, kk: (bb, i, j))
        semantics = ("parallel", "parallel", "parallel", "arbitrary")

    return pl.pallas_call(
        kernel,
        out_shape=jax.ShapeDtypeStruct((b, cout, hw), out_dtype),
        grid_spec=pltpu.PrefetchScalarGridSpec(
            num_scalar_prefetch=0,
            grid=grid,
            in_specs=in_specs,
            out_specs=out_spec),
        compiler_params=pltpu.CompilerParams(dimension_semantics=semantics),
        cost_estimate=cost,
    )(w_mat, x, scale, shift)


# -----------------------------------------------------------------------------
# ConvBlock parameters: raw (PyTorch-like) init + one-time prepare (fold/cast)
# -----------------------------------------------------------------------------
def _fold_bn(gamma, beta, mean, var, eps=1e-5):
    scale = gamma / jnp.sqrt(var + eps)
    shift = beta - mean * scale
    return scale, shift


def init_conv_block_params(key, in_channels=128, out_channels=256,
                           kernel_size=1, num_layer=1):
    """Raw parameters: conv weight/bias + BatchNorm affine & running stats."""
    layers = []
    cin = in_channels
    for _ in range(num_layer):
        key, kw_, kb_, kg_, kbe_, km_, kv_ = jax.random.split(key, 7)
        fan_in = cin * kernel_size * kernel_size
        layers.append(dict(
            w=jax.random.normal(kw_, (out_channels, cin, kernel_size, kernel_size),
                                jnp.float32) * (2.0 / fan_in) ** 0.5,
            b=0.05 * jax.random.normal(kb_, (out_channels,), jnp.float32),
            gamma=1.0 + 0.1 * jax.random.normal(kg_, (out_channels,), jnp.float32),
            beta=0.1 * jax.random.normal(kbe_, (out_channels,), jnp.float32),
            mean=0.1 * jax.random.normal(km_, (out_channels,), jnp.float32),
            var=1.0 + 0.1 * jnp.abs(jax.random.normal(kv_, (out_channels,), jnp.float32)),
        ))
        cin = out_channels
    return {"layers": layers}


def prepare_conv_block_params(params):
    """One-time folding/casting so the per-call forward does zero wrapper math:
    weight -> (Cout, kh, kw, Cin) bf16; BN stats + conv bias -> f32 scale/shift."""
    prepared = []
    for layer in params["layers"]:
        w = layer["w"]
        cout = w.shape[0]
        scale, shift = _fold_bn(layer["gamma"], layer["beta"],
                                layer["mean"], layer["var"])
        shift = shift + scale * layer["b"]                 # fold conv bias into shift
        prepared.append(dict(
            w=jnp.transpose(w, (0, 2, 3, 1)).astype(jnp.bfloat16),  # (Cout,kh,kw,Cin)
            scale=scale.reshape(cout, 1).astype(jnp.float32),
            shift=shift.reshape(cout, 1).astype(jnp.float32),
        ))
    return {"layers": prepared}


# -----------------------------------------------------------------------------
# ConvBlock forward: conv_1 -> bn_1 -> relu_1 (-> conv_i -> bn_i for i >= 2).
# Faithful to the reference module: relu_i for i>=2 are registered on the module,
# not in self.block, so forward does NOT apply them.
# -----------------------------------------------------------------------------
def conv_block_forward(prepared, x_nchw):
    x = x_nchw
    layers = prepared["layers"]
    for li, layer in enumerate(layers):
        w4 = layer["w"]                                     # (Cout, kh, kw, Cin) bf16
        cout, kh, kw, cin = w4.shape
        n, cin_x, h, wdim = x.shape
        assert cin_x == cin
        ho, wo = h - kh + 1, wdim - kw + 1

        if kh == 1 and kw == 1:
            cols = x.reshape(n, cin, h * wdim)              # free reshape, no transpose
        else:
            # TODO(synk): stream taps through a K grid with shifted index_maps instead
            # of materializing im2col in HBM (path not exercised at module defaults).
            taps = [x[:, :, i:i + ho, j:j + wo].reshape(n, cin, ho * wo)
                    for i in range(kh) for j in range(kw)]
            cols = jnp.concatenate(taps, axis=1)            # (N, kh*kw*Cin, Ho*Wo)

        out_dtype = jnp.float32 if li == len(layers) - 1 else jnp.bfloat16
        y = fused_conv1x1_bn(cols, w4.reshape(cout, kh * kw * cin),
                             layer["scale"], layer["shift"],
                             apply_relu=(li == 0), out_dtype=out_dtype)
        x = y.reshape(n, cout, ho, wo)                      # NCHW natively, no transpose
    return x


# -----------------------------------------------------------------------------
# Pure-JAX reference (bf16-cast matmul inputs to mimic MXU input precision)
# -----------------------------------------------------------------------------
def conv_block_reference(params, x_nchw):
    x = x_nchw
    num = len(params["layers"])
    for li, layer in enumerate(params["layers"]):
        xb = x.astype(jnp.bfloat16)
        wb = layer["w"].astype(jnp.bfloat16)
        y = jax.lax.conv_general_dilated(
            xb, wb, window_strides=(1, 1), padding="VALID",
            dimension_numbers=("NCHW", "OIHW", "NCHW"),
            preferred_element_type=jnp.float32)
        y = y + layer["b"][None, :, None, None]
        scale, shift = _fold_bn(layer["gamma"], layer["beta"],
                                layer["mean"], layer["var"])
        y = y * scale[None, :, None, None] + shift[None, :, None, None]
        if li == 0:
            y = jnp.maximum(y, 0.0)
        if li < num - 1:
            y = y.astype(jnp.bfloat16).astype(jnp.float32)  # mimic bf16 intermediates
        x = y
    return x


if __name__ == "__main__":
    key = jax.random.PRNGKey(0)
    pkey, xkey = jax.random.split(key)

    IN_C, OUT_C, KSIZE, NUM_LAYER = 128, 256, 1, 1          # ConvBlock defaults
    raw_params = init_conv_block_params(pkey, IN_C, OUT_C, KSIZE, NUM_LAYER)
    prepared = prepare_conv_block_params(raw_params)        # one-time, outside jit

    x = jax.random.normal(xkey, (2, IN_C, 16, 16), jnp.float32)   # (N, C, H, W)

    fwd = jax.jit(conv_block_forward)
    out = jax.block_until_ready(fwd(prepared, x))

    assert out.shape == (2, OUT_C, 16, 16) and out.dtype == jnp.float32
    assert bool(jnp.all(jnp.isfinite(out)))

    ref = conv_block_reference(raw_params, x)
    max_err = float(jnp.max(jnp.abs(out - ref)))
    assert bool(jnp.allclose(out, ref, atol=1e-2, rtol=1e-2)), max_err

    print("KERNEL_OK")
</pallas_src>

<mosaic_0001>
module attributes {stable_mosaic.version = 11 : i64} {
  func.func @_fused_kernel_1pass(%arg0: i32, %arg1: i32, %arg2: i32, %arg3: memref<256x128xbf16, #tpu.memory_space<vmem>>, %arg4: memref<1x128x256xf32, #tpu.memory_space<vmem>>, %arg5: memref<256x1xf32, #tpu.memory_space<vmem>>, %arg6: memref<256x1xf32, #tpu.memory_space<vmem>>, %arg7: memref<1x256x256xf32, #tpu.memory_space<vmem>>) attributes {dimension_semantics = [#tpu.dimension_semantics<parallel>, #tpu.dimension_semantics<parallel>, #tpu.dimension_semantics<parallel>], iteration_bounds = array<i64: 2, 1, 1>, scalar_prefetch = 0 : i64, scratch_operands = 0 : i64, tpu.core_type = #tpu.core_type<tc>, window_params = [{transform_indices = @transform_0, window_bounds = array<i64: 256, 128>}, {transform_indices = @transform_1, window_bounds = array<i64: 1, 128, 256>}, {transform_indices = @transform_2, window_bounds = array<i64: 256, 1>}, {transform_indices = @transform_3, window_bounds = array<i64: 256, 1>}, {transform_indices = @transform_4, window_bounds = array<i64: 1, 256, 256>}]} {
    %c0 = arith.constant 0 : index
    %c0_0 = arith.constant 0 : index
    %0 = vector.load %arg3[%c0, %c0_0] : memref<256x128xbf16, #tpu.memory_space<vmem>>, vector<256x128xbf16>
    %c0_1 = arith.constant 0 : index
    %c0_2 = arith.constant 0 : index
    %c0_3 = arith.constant 0 : index
    %1 = vector.load %arg4[%c0_1, %c0_2, %c0_3] : memref<1x128x256xf32, #tpu.memory_space<vmem>>, vector<1x128x256xf32>
    %2 = vector.shape_cast %1 : vector<1x128x256xf32> to vector<128x256xf32>
    %3 = arith.truncf %2 : vector<128x256xf32> to vector<128x256xbf16>
    %cst = arith.constant dense<0.000000e+00> : vector<256x256xf32>
    %4 = tpu.matmul %0, %3, %cst {dimension_numbers = #tpu.dot_dimension_numbers<[1], [0], [0], [1], [0, 0, 1, 1], [], []>} : vector<256x128xbf16>, vector<128x256xbf16>, vector<256x256xf32> -> vector<256x256xf32>
    %c0_4 = arith.constant 0 : index
    %c0_5 = arith.constant 0 : index
    %5 = vector.load %arg5[%c0_4, %c0_5] : memref<256x1xf32, #tpu.memory_space<vmem>>, vector<256x1xf32>
    %6 = vector.broadcast %5 : vector<256x1xf32> to vector<256x256xf32>
    %7 = arith.mulf %4, %6 : vector<256x256xf32>
    %c0_6 = arith.constant 0 : index
    %c0_7 = arith.constant 0 : index
    %8 = vector.load %arg6[%c0_6, %c0_7] : memref<256x1xf32, #tpu.memory_space<vmem>>, vector<256x1xf32>
    %9 = vector.broadcast %8 : vector<256x1xf32> to vector<256x256xf32>
    %10 = arith.addf %7, %9 : vector<256x256xf32>
    %cst_8 = arith.constant 0.000000e+00 : f32
    %11 = vector.broadcast %cst_8 : f32 to vector<256x256xf32>
    %12 = arith.maximumf %10, %11 : vector<256x256xf32>
    %c0_9 = arith.constant 0 : index
    %c0_10 = arith.constant 0 : index
    %c0_11 = arith.constant 0 : index
    %13 = vector.load %arg7[%c0_9, %c0_10, %c0_11] : memref<1x256x256xf32, #tpu.memory_space<vmem>>, vector<1x256x256xf32>
    %14 = vector.shape_cast %13 : vector<1x256x256xf32> to vector<256x256xf32>
    %15 = vector.shape_cast %12 : vector<256x256xf32> to vector<1x256x256xf32>
    tpu.vector_store %arg7[%c0_9, %c0_10, %c0_11], %15 {strides = array<i32>} : memref<1x256x256xf32, #tpu.memory_space<vmem>>, vector<1x256x256xf32>,
    return
  }
  func.func @transform_0(%arg0: i32, %arg1: i32, %arg2: i32) -> (i32, i32) {
    %c0_i32 = arith.constant 0 : i32
    %c0_i32_0 = arith.constant 0 : i32
    return %arg1, %c0_i32 : i32, i32
  }
  func.func @transform_1(%arg0: i32, %arg1: i32, %arg2: i32) -> (i32, i32, i32) {
    %c0_i32 = arith.constant 0 : i32
    %c0_i32_0 = arith.constant 0 : i32
    return %arg0, %c0_i32, %arg2 : i32, i32, i32
  }
  func.func @transform_2(%arg0: i32, %arg1: i32, %arg2: i32) -> (i32, i32) {
    %c0_i32 = arith.constant 0 : i32
    %c0_i32_0 = arith.constant 0 : i32
    return %arg1, %c0_i32 : i32, i32
  }
  func.func @transform_3(%arg0: i32, %arg1: i32, %arg2: i32) -> (i32, i32) {
    %c0_i32 = arith.constant 0 : i32
    %c0_i32_0 = arith.constant 0 : i32
    return %arg1, %c0_i32 : i32, i32
  }
  func.func @transform_4(%arg0: i32, %arg1: i32, %arg2: i32) -> (i32, i32, i32) {
    %c0_i32 = arith.constant 0 : i32
    return %arg0, %arg1, %arg2 : i32, i32, i32
  }
}

</mosaic_0001>

<llo_original>
// kernel: conv_block_forward.1
$region0: #{conv_block_forward.1}
  #allocation0 [shape = 'u32[]', space=smem, size = 0x4, offset = 0x4, fixed_abs, tag = 'smem constant byte address 0x4 - core index']
  #allocation1 [shape = 'u32[72,128]{1,0:T(1,128)}', space=vmem, size = 0x9000, scoped, tag = 'internal scratch']
  %s0 = inlined_call_operand.vmem [shape: bf16[256,128], index: 0, kind: input, shape index: {}]
  %s1 = inlined_call_operand.vmem [shape: f32[2,128,256], index: 1, kind: input, shape index: {}]
  %s2 = inlined_call_operand.vmem [shape: f32[256,1], index: 2, kind: input, shape index: {}]
  %s3 = inlined_call_operand.vmem [shape: f32[256,1], index: 3, kind: input, shape index: {}]
  %s4 = inlined_call_operand.vmem [shape: f32[2,256,256], index: 4, kind: output, shape index: {}]
  %s5 = sld [smem:[#allocation0]]
  $region49: #{conv_block_forward.1} parent=0
    _
  %s7 = ssub.s32 1, %s5
  %s8 = scalar_select 0, %s7, %s5
  loop: start=0, step=1, limit=4
  $region2: #{conv_block_forward.1} parent=0 // loop_pre_header
    _
  $region3: #{conv_block_forward.1} parent=0 // loop_header
    %s10 = sphi 0, %s14
    %p11 = scmp.ge.s32.totalorder %s10, 4
    %s17 = sphi 0, %s36
    %s18 = sphi 0, %s32
    %s19 = sphi 0, %s28
    %s20 = sphi 0, %s17
    %s21 = sphi 0, %s18
    %s22 = sphi 0, %s19
    %s23 = sphi 0, %s20
    %s24 = sphi 0, %s21
    %s25 = sphi 0, %s22
    %s39 = sphi 0, %s41
    %s42 = sphi 0, %s39
    %s43 = sphi 0, %s42
    %s59 = sphi 0, %s43
    %s67 = sphi 0, %s69
    %s70 = sphi 0, %s67
    %s71 = sphi 0, %s70
    %s87 = sphi 0, %s71
    %s93 = sphi 0, %s95
    %s96 = sphi 0, %s93
    %s97 = sphi 0, %s96
    %s113 = sphi 0, %s97
    %s119 = sphi 0, %s121
    %s122 = sphi 0, %s119
    %s123 = sphi 0, %s122
    %s139 = sphi 0, %s123
    %s149 = sphi 0, %s151
    %s152 = sphi 0, %s149
    %s153 = sphi 0, %s152
    %s169 = sphi 0, %s153
  $region4: #{conv_block_forward.1} parent=0 // loop_header_branch
    %13 = sbr.rel (%p11) target = $region8
  $region5: #{conv_block_forward.1} parent=0 // loop_body
    %s15 = ssub.s32 %s10, 1
    %s16 = ssub.s32 %s10, 2
    %s26 = sadd.s32 1, %s19
    %p27 = scmp.ge.s32.totalorder %s26, 1
    %s28 = scalar_select %p27, 0, %s26
    %s29 = sadd.s32 1, %s18
    %s30 = scalar_select %p27, %s29, %s18
    %p31 = scmp.ge.s32.totalorder %s30, 1
    %s32 = scalar_select %p31, 0, %s30
    %s33 = sadd.s32 1, %s17
    %s34 = scalar_select %p31, %s33, %s17
    %p35 = scmp.ge.s32.totalorder %s34, 2
    %s36 = scalar_select %p35, 0, %s34
    %s37 = ssub.s32 %s18, %s32
    %p38 = scmp.eq.s32.totalorder %s37, 0
    %s40 = sadd.s32 %s39, 1
    %s41 = scalar_select %p38, %s39, %s40
    %p44 = pneg %p38
    %p45 = scmp.eq.s32.totalorder %s10, 1
    %p46 = por %p44, %p45
    %p47 = scmp.ne.s32.totalorder %s39, %s42
    %p48 = scmp.eq.s32.totalorder %s10, 0
    %p49 = por %p47, %p48
    %p50 = scmp.ne.s32.totalorder %s39, %s42
    %p51 = scmp.eq.s32.totalorder %s15, 1
    %p52 = por %p50, %p51
    %p53 = scmp.ne.s32.totalorder %s42, %s43
    %p54 = scmp.eq.s32.totalorder %s15, 0
    %p55 = por %p53, %p54
    %p56 = scmp.ne.s32.totalorder %s42, %s43
    %p57 = scmp.eq.s32.totalorder %s16, 1
    %p58 = por %p56, %p57
    %p60 = scmp.ne.s32.totalorder %s43, %s59
    %p61 = scmp.eq.s32.totalorder %s16, 0
    %p62 = por %p60, %p61
    %s63 = ssub.s32 %s17, %s36
    %s64 = ssub.s32 %s19, %s28
    %s65 = sor.u32 %s63, %s64
    %p66 = scmp.eq.s32.totalorder %s65, 0
    %s68 = sadd.s32 %s67, 1
    %s69 = scalar_select %p66, %s67, %s68
    %p72 = pneg %p66
    %p73 = scmp.eq.s32.totalorder %s10, 1
    %p74 = por %p72, %p73
    %p75 = scmp.ne.s32.totalorder %s67, %s70
    %p76 = scmp.eq.s32.totalorder %s10, 0
    %p77 = por %p75, %p76
    %p78 = scmp.ne.s32.totalorder %s67, %s70
    %p79 = scmp.eq.s32.totalorder %s15, 1
    %p80 = por %p78, %p79
    %p81 = scmp.ne.s32.totalorder %s70, %s71
    %p82 = scmp.eq.s32.totalorder %s15, 0
    %p83 = por %p81, %p82
    %p84 = scmp.ne.s32.totalorder %s70, %s71
    %p85 = scmp.eq.s32.totalorder %s16, 1
    %p86 = por %p84, %p85
    %p88 = scmp.ne.s32.totalorder %s71, %s87
    %p89 = scmp.eq.s32.totalorder %s16, 0
    %p90 = por %p88, %p89
    %s91 = ssub.s32 %s18, %s32
    %p92 = scmp.eq.s32.totalorder %s91, 0
    %s94 = sadd.s32 %s93, 1
    %s95 = scalar_select %p92, %s93, %s94
    %p98 = pneg %p92
    %p99 = scmp.eq.s32.totalorder %s10, 1
    %p100 = por %p98, %p99
    %p101 = scmp.ne.s32.totalorder %s93, %s96
    %p102 = scmp.eq.s32.totalorder %s10, 0
    %p103 = por %p101, %p102
    %p104 = scmp.ne.s32.totalorder %s93, %s96
    %p105 = scmp.eq.s32.totalorder %s15, 1
    %p106 = por %p104, %p105
    %p107 = scmp.ne.s32.totalorder %s96, %s97
    %p108 = scmp.eq.s32.totalorder %s15, 0
    %p109 = por %p107, %p108
    %p110 = scmp.ne.s32.totalorder %s96, %s97
    %p111 = scmp.eq.s32.totalorder %s16, 1
    %p112 = por %p110, %p111
    %p114 = scmp.ne.s32.totalorder %s97, %s113
    %p115 = scmp.eq.s32.totalorder %s16, 0
    %p116 = por %p114, %p115
    %s117 = ssub.s32 %s18, %s32
    %p118 = scmp.eq.s32.totalorder %s117, 0
    %s120 = sadd.s32 %s119, 1
    %s121 = scalar_select %p118, %s119, %s120
    %p124 = pneg %p118
    %p125 = scmp.eq.s32.totalorder %s10, 1
    %p126 = por %p124, %p125
    %p127 = scmp.ne.s32.totalorder %s119, %s122
    %p128 = scmp.eq.s32.totalorder %s10, 0
    %p129 = por %p127, %p128
    %p130 = scmp.ne.s32.totalorder %s119, %s122
    %p131 = scmp.eq.s32.totalorder %s15, 1
    %p132 = por %p130, %p131
    %p133 = scmp.ne.s32.totalorder %s122, %s123
    %p134 = scmp.eq.s32.totalorder %s15, 0
    %p135 = por %p133, %p134
    %p136 = scmp.ne.s32.totalorder %s122, %s123
    %p137 = scmp.eq.s32.totalorder %s16, 1
    %p138 = por %p136, %p137
    %p140 = scmp.ne.s32.totalorder %s123, %s139
    %p141 = scmp.eq.s32.totalorder %s16, 0
    %p142 = por %p140, %p141
    %s143 = ssub.s32 %s17, %s36
    %s144 = ssub.s32 %s18, %s32
    %s145 = sor.u32 %s143, %s144
    %s146 = ssub.s32 %s19, %s28
    %s147 = sor.u32 %s145, %s146
    %p148 = scmp.eq.s32.totalorder %s147, 0
    %s150 = sadd.s32 %s149, 1
    %s151 = scalar_select %p148, %s149, %s150
    %p154 = pneg %p148
    %p155 = scmp.eq.s32.totalorder %s10, 1
    %p156 = por %p154, %p155
    %p157 = scmp.ne.s32.totalorder %s149, %s152
    %p158 = scmp.eq.s32.totalorder %s10, 0
    %p159 = por %p157, %p158
    %p160 = scmp.ne.s32.totalorder %s149, %s152
    %p161 = scmp.eq.s32.totalorder %s15, 1
    %p162 = por %p160, %p161
    %p163 = scmp.ne.s32.totalorder %s152, %s153
    %p164 = scmp.eq.s32.totalorder %s15, 0
    %p165 = por %p163, %p164
    %p166 = scmp.ne.s32.totalorder %s152, %s153
    %p167 = scmp.eq.s32.totalorder %s16, 1
    %p168 = por %p166, %p167
    %p170 = scmp.ne.s32.totalorder %s153, %s169
    %p171 = scmp.eq.s32.totalorder %s16, 0
    %p172 = por %p170, %p171
    %p173 = scmp.le.s32.totalorder 1, %s10
    %p174 = scmp.lt.s32.totalorder %s10, 3
    %p175 = pnand %p173, %p174
    %p176 = pneg %p175
    // Predicated region
    $region9: #{conv_block_forward.1} parent=5 // pred_check
      _
    $region10: #{conv_block_forward.1} parent=5 // pred_check_branch
      %178 = sbr.rel (%p175) target = $region12
    $region11: #{conv_block_forward.1} parent=5 // pred_region
      %s179 = ssub.s32 %s10, 1
      // Predicated region
      $region13: #{conv_block_forward.1} parent=11 // pred_check
        %p180 = pneg %p55
      $region14: #{conv_block_forward.1} parent=11 // pred_check_branch
        %182 = sbr.rel (%p180) target = $region16
      $region15: #{conv_block_forward.1} parent=11 // pred_region
        %s183 = smul.u32 32, %s21
        %p184 = scmp.lt.s32.totalorder %s183, 31
        %s185 = scalar_select %p184, %s183, 31
        %s186 = smul.addr %s185, 4
        %s187 = scalar_lea.vmem %s0, %s186
        %s188 = smul.u32 32, %s21
      $region16: #{conv_block_forward.1} parent=11 // pred_fallthru
        _
      // Predicated region
      $region17: #{conv_block_forward.1} parent=11 // pred_check
        %p189 = pneg %p109
      $region18: #{conv_block_forward.1} parent=11 // pred_check_branch
        %191 = sbr.rel (%p189) target = $region20
      $region19: #{conv_block_forward.1} parent=11 // pred_region
        %s192 = smul.u32 32, %s21
        %p193 = scmp.lt.s32.totalorder %s192, 31
        %s194 = scalar_select %p193, %s192, 31
        %s195 = smul.addr %s194, 8
        %s196 = scalar_lea.vmem %s2, %s195
        %s197 = smul.u32 32, %s21
      $region20: #{conv_block_forward.1} parent=11 // pred_fallthru
        _
      // Predicated region
      $region21: #{conv_block_forward.1} parent=11 // pred_check
        %p198 = pneg %p135
      $region22: #{conv_block_forward.1} parent=11 // pred_check_branch
        %200 = sbr.rel (%p198) target = $region24
      $region23: #{conv_block_forward.1} parent=11 // pred_region
        %s201 = smul.u32 32, %s21
        %p202 = scmp.lt.s32.totalorder %s201, 31
        %s203 = scalar_select %p202, %s201, 31
        %s204 = smul.addr %s203, 8
        %s205 = scalar_lea.vmem %s3, %s204
        %s206 = smul.u32 32, %s21
      $region24: #{conv_block_forward.1} parent=11 // pred_fallthru
        _
    $region12: #{conv_block_forward.1} parent=5 // pred_fallthru
      _
    %p207 = scmp.lt.s32.totalorder %s10, 2
    // Predicated region
    $region25: #{conv_block_forward.1} parent=5 // pred_check
      %p208 = pneg %p207
    $region26: #{conv_block_forward.1} parent=5 // pred_check_branch
      %210 = sbr.rel (%p208) target = $region28
    $region27: #{conv_block_forward.1} parent=5 // pred_region
      // Predicated region
      $region29: #{conv_block_forward.1} parent=27 // pred_check
        %p211 = pneg %p77
      $region30: #{conv_block_forward.1} parent=27 // pred_check_branch
        %213 = sbr.rel (%p211) target = $region32
      $region31: #{conv_block_forward.1} parent=27 // pred_region
        %s214 = smul.u32 2, %s19
        %p215 = scmp.lt.s32.totalorder %s17, 1
        %s216 = scalar_select %p215, %s17, 1
        %p217 = scmp.lt.s32.totalorder %s214, 1
        %s218 = scalar_select %p217, %s214, 1
        %s219 = smul.addr %s216, 32
        %s220 = sadd.s32 %s218, %s219
        %s221 = smul.addr %s220, 8
        %s222 = scalar_lea.vmem %s1, %s221
        %s223 = smul.u32 2, %s19
      $region32: #{conv_block_forward.1} parent=27 // pred_fallthru
        _
    $region28: #{conv_block_forward.1} parent=5 // pred_fallthru
      _
    %p224 = scmp.le.s32.totalorder 1, %s10
    %p225 = scmp.lt.s32.totalorder %s10, 3
    %p226 = pnand %p224, %p225
    %p227 = pneg %p226
    // Predicated region
    $region33: #{conv_block_forward.1} parent=5 // pred_check
      _
    $region34: #{conv_block_forward.1} parent=5 // pred_check_branch
      %229 = sbr.rel (%p226) target = $region36
    $region35: #{conv_block_forward.1} parent=5 // pred_region
      %s230 = ssub.s32 %s10, 1
      %s231 = smul.u32 32, %s21
      %p232 = scmp.lt.s32.totalorder %s231, 31
      %s233 = scalar_select %p232, %s231, 31
      %s234 = smul.addr %s233, 4
      %s235 = scalar_lea.vmem %s0, %s234
      %p236 = pneg %p55
      %p237 = pneg %p52
      %s238 = smul.u32 2, %s22
      %p239 = scmp.lt.s32.totalorder %s20, 1
      %s240 = scalar_select %p239, %s20, 1
      %p241 = scmp.lt.s32.totalorder %s238, 1
      %s242 = scalar_select %p241, %s238, 1
      %s243 = smul.addr %s240, 32
      %s244 = sadd.s32 %s242, %s243
      %s245 = smul.addr %s244, 8
      %s246 = scalar_lea.vmem %s1, %s245
      %p247 = pneg %p83
      %p248 = pneg %p80
      %s249 = smul.u32 32, %s21
      %p250 = scmp.lt.s32.totalorder %s249, 31
      %s251 = scalar_select %p250, %s249, 31
      %s252 = smul.addr %s251, 8
      %s253 = scalar_lea.vmem %s2, %s252
      %p254 = pneg %p109
      %p255 = pneg %p106
      %s256 = smul.u32 32, %s21
      %p257 = scmp.lt.s32.totalorder %s256, 31
      %s258 = scalar_select %p257, %s256, 31
      %s259 = smul.addr %s258, 8
      %s260 = scalar_lea.vmem %s3, %s259
      %p261 = pneg %p135
      %p262 = pneg %p132
      %p263 = pneg %p165
      %p264 = pneg %p162
      %s265 = smul.u32 32, %s21
      %s266 = smul.u32 2, %s22
      %p267 = scmp.lt.s32.totalorder %s20, 1
      %s268 = scalar_select %p267, %s20, 1
      %p269 = scmp.lt.s32.totalorder %s265, 31
      %s270 = scalar_select %p269, %s265, 31
      %p271 = scmp.lt.s32.totalorder %s266, 1
      %s272 = scalar_select %p271, %s266, 1
      %s273 = smul.addr %s270, 2
      %s274 = sadd.s32 %s272, %s273
      %s275 = smul.addr %s268, 64
      %s276 = sadd.s32 %s274, %s275
      %s277 = smul.addr %s276, 8
      %s278 = scalar_lea.vmem %s4, %s277
      %s279 = smul.u32 32, %s21
      %p280 = scmp.lt.s32.totalorder %s279, 31
      %s281 = scalar_select %p280, %s279, 31
      %s282 = smul.addr %s281, 4
      %s283 = scalar_lea.vmem %s0, %s282
      %s284 = smul.u32 32, %s21
      %s285 = smul.u32 2, %s22
      %p286 = scmp.lt.s32.totalorder %s20, 1
      %s287 = scalar_select %p286, %s20, 1
      %p288 = scmp.lt.s32.totalorder %s285, 1
      %s289 = scalar_select %p288, %s285, 1
      %s290 = smul.addr %s287, 32
      %s291 = sadd.s32 %s289, %s290
      %s292 = smul.addr %s291, 8
      %s293 = scalar_lea.vmem %s1, %s292
      %s294 = smul.u32 2, %s22
      %s295 = smul.u32 32, %s21
      %p296 = scmp.lt.s32.totalorder %s295, 31
      %s297 = scalar_select %p296, %s295, 31
      %s298 = smul.addr %s297, 8
      %s299 = scalar_lea.vmem %s2, %s298
      %s300 = smul.u32 32, %s21
      %s301 = smul.u32 32, %s21
      %p302 = scmp.lt.s32.totalorder %s301, 31
      %s303 = scalar_select %p302, %s301, 31
      %s304 = smul.addr %s303, 8
      %s305 = scalar_lea.vmem %s3, %s304
      %s306 = smul.u32 32, %s21
      %s307 = smul.u32 32, %s21
      %s308 = smul.u32 2, %s22
      %p309 = scmp.lt.s32.totalorder %s20, 1
      %s310 = scalar_select %p309, %s20, 1
      %p311 = scmp.lt.s32.totalorder %s307, 31
      %s312 = scalar_select %p311, %s307, 31
      %p313 = scmp.lt.s32.totalorder %s308, 1
      %s314 = scalar_select %p313, %s308, 1
      %s315 = smul.addr %s312, 2
      %s316 = sadd.s32 %s314, %s315
      %s317 = smul.addr %s310, 64
      %s318 = sadd.s32 %s316, %s317
      %s319 = smul.addr %s318, 8
      %s320 = scalar_lea.vmem %s4, %s319
      %s321 = smul.u32 32, %s21
      %s322 = smul.u32 2, %s22
      %v323 = vld [vmem:[%s283] sm:$0xf]
      %v324 = vld [vmem:[%s283 + $0x4] sm:$0xf]
      %v325 = vld [vmem:[%s283 + $0x8] sm:$0xf]
      %v326 = vld [vmem:[%s283 + $0xc] sm:$0xf]
      %v327 = vld [vmem:[%s283 + $0x10] sm:$0xf]
      %v328 = vld [vmem:[%s283 + $0x14] sm:$0xf]
      %v329 = vld [vmem:[%s283 + $0x18] sm:$0xf]
      %v330 = vld [vmem:[%s283 + $0x1c] sm:$0xf]
      %v331 = vld [vmem:[%s283 + $0x20] sm:$0xf]
      %v332 = vld [vmem:[%s283 + $0x24] sm:$0xf]
      %v333 = vld [vmem:[%s283 + $0x28] sm:$0xf]
      %v334 = vld [vmem:[%s283 + $0x2c] sm:$0xf]
      %v335 = vld [vmem:[%s283 + $0x30] sm:$0xf]
      %v336 = vld [vmem:[%s283 + $0x34] sm:$0xf]
      %v337 = vld [vmem:[%s283 + $0x38] sm:$0xf]
      %v338 = vld [vmem:[%s283 + $0x3c] sm:$0xf]
      %v339 = vld [vmem:[%s283 + $0x40] sm:$0xf]
      %v340 = vld [vmem:[%s283 + $0x44] sm:$0xf]
      %v341 = vld [vmem:[%s283 + $0x48] sm:$0xf]
      %v342 = vld [vmem:[%s283 + $0x4c] sm:$0xf]
      %v343 = vld [vmem:[%s283 + $0x50] sm:$0xf]
      %v344 = vld [vmem:[%s283 + $0x54] sm:$0xf]
      %v345 = vld [vmem:[%s283 + $0x58] sm:$0xf]
      %v346 = vld [vmem:[%s283 + $0x5c] sm:$0xf]
      %v347 = vld [vmem:[%s283 + $0x60] sm:$0xf]
      %v348 = vld [vmem:[%s283 + $0x64] sm:$0xf]
      %v349 = vld [vmem:[%s283 + $0x68] sm:$0xf]
      %v350 = vld [vmem:[%s283 + $0x6c] sm:$0xf]
      %v351 = vld [vmem:[%s283 + $0x70] sm:$0xf]
      %v352 = vld [vmem:[%s283 + $0x74] sm:$0xf]
      %v353 = vld [vmem:[%s283 + $0x78] sm:$0xf]
      %v354 = vld [vmem:[%s283 + $0x7c] sm:$0xf]
      %v355 = vld [vmem:[%s293] sm:$0xff]
      %v356 = vld [vmem:[%s293 + $0x8] sm:$0xff]
      %v357 = vld [vmem:[%s293 + $0x10] sm:$0xff]
      %v358 = vld [vmem:[%s293 + $0x18] sm:$0xff]
      %v359 = vld [vmem:[%s293 + $0x20] sm:$0xff]
      %v360 = vld [vmem:[%s293 + $0x28] sm:$0xff]
      %v361 = vld [vmem:[%s293 + $0x30] sm:$0xff]
      %v362 = vld [vmem:[%s293 + $0x38] sm:$0xff]
      %v363 = vld [vmem:[%s293 + $0x40] sm:$0xff]
      %v364 = vld [vmem:[%s293 + $0x48] sm:$0xff]
      %v365 = vld [vmem:[%s293 + $0x50] sm:$0xff]
      %v366 = vld [vmem:[%s293 + $0x58] sm:$0xff]
      %v367 = vld [vmem:[%s293 + $0x60] sm:$0xff]
      %v368 = vld [vmem:[%s293 + $0x68] sm:$0xff]
      %v369 = vld [vmem:[%s293 + $0x70] sm:$0xff]
      %v370 = vld [vmem:[%s293 + $0x78] sm:$0xff]
      %v371 = vld [vmem:[%s293 + $0x80] sm:$0xff]
      %v372 = vld [vmem:[%s293 + $0x88] sm:$0xff]
      %v373 = vld [vmem:[%s293 + $0x90] sm:$0xff]
      %v374 = vld [vmem:[%s293 + $0x98] sm:$0xff]
      %v375 = vld [vmem:[%s293 + $0xa0] sm:$0xff]
      %v376 = vld [vmem:[%s293 + $0xa8] sm:$0xff]
      %v377 = vld [vmem:[%s293 + $0xb0] sm:$0xff]
      %v378 = vld [vmem:[%s293 + $0xb8] sm:$0xff]
      %v379 = vld [vmem:[%s293 + $0xc0] sm:$0xff]
      %v380 = vld [vmem:[%s293 + $0xc8] sm:$0xff]
      %v381 = vld [vmem:[%s293 + $0xd0] sm:$0xff]
      %v382 = vld [vmem:[%s293 + $0xd8] sm:$0xff]
      %v383 = vld [vmem:[%s293 + $0xe0] sm:$0xff]
      %v384 = vld [vmem:[%s293 + $0xe8] sm:$0xff]
      %v385 = vld [vmem:[%s293 + $0xf0] sm:$0xff]
      %v386 = vld [vmem:[%s293 + $0xf8] sm:$0xff]
      %v387 = vpack.c.bf16 %v357, %v355
      %v388 = vpack.c.bf16 %v358, %v356
      %v389 = vpack.c.bf16 %v361, %v359
      %v390 = vpack.c.bf16 %v362, %v360
      %v391 = vpack.c.bf16 %v365, %v363
      %v392 = vpack.c.bf16 %v366, %v364
      %v393 = vpack.c.bf16 %v369, %v367
      %v394 = vpack.c.bf16 %v370, %v368
      %v395 = vpack.c.bf16 %v373, %v371
      %v396 = vpack.c.bf16 %v374, %v372
      %v397 = vpack.c.bf16 %v377, %v375
      %v398 = vpack.c.bf16 %v378, %v376
      %v399 = vpack.c.bf16 %v381, %v379
      %v400 = vpack.c.bf16 %v382, %v380
      %v401 = vpack.c.bf16 %v385, %v383
      %v402 = vpack.c.bf16 %v386, %v384
      %v435 = vunpack.c.l.b16 %v323
      %v436 = vunpack.c.l.b16 %v324
      %v437 = vunpack.c.l.b16 %v325
      %v438 = vunpack.c.l.b16 %v326
      %v439 = vunpack.c.l.b16 %v327
      %v440 = vunpack.c.l.b16 %v328
      %v441 = vunpack.c.l.b16 %v329
      %v442 = vunpack.c.l.b16 %v330
      %v443 = vunpack.c.l.b16 %v331
      %v444 = vunpack.c.l.b16 %v332
      %v445 = vunpack.c.l.b16 %v333
      %v446 = vunpack.c.l.b16 %v334
      %v447 = vunpack.c.l.b16 %v335
      %v448 = vunpack.c.l.b16 %v336
      %v449 = vunpack.c.l.b16 %v337
      %v450 = vunpack.c.l.b16 %v338
      %v451 = vunpack.c.l.b16 %v339
      %v452 = vunpack.c.l.b16 %v340
      %v453 = vunpack.c.l.b16 %v341
      %v454 = vunpack.c.l.b16 %v342
      %v455 = vunpack.c.l.b16 %v343
      %v456 = vunpack.c.l.b16 %v344
      %v457 = vunpack.c.l.b16 %v345
      %v458 = vunpack.c.l.b16 %v346
      %v459 = vunpack.c.l.b16 %v347
      %v460 = vunpack.c.l.b16 %v348
      %v461 = vunpack.c.l.b16 %v349
      %v462 = vunpack.c.l.b16 %v350
      %v463 = vunpack.c.l.b16 %v351
      %v464 = vunpack.c.l.b16 %v352
      %v465 = vunpack.c.l.b16 %v353
      %v466 = vunpack.c.l.b16 %v354
      %v467 = vpack.c.b16 %v436, %v435
      %v468 = vpack.c.b16 %v438, %v437
      %v469 = vpack.c.b16 %v440, %v439
      %v470 = vpack.c.b16 %v442, %v441
      %v471 = vpack.c.b16 %v444, %v443
      %v472 = vpack.c.b16 %v446, %v445
      %v473 = vpack.c.b16 %v448, %v447
      %v474 = vpack.c.b16 %v450, %v449
      %v475 = vpack.c.b16 %v452, %v451
      %v476 = vpack.c.b16 %v454, %v453
      %v477 = vpack.c.b16 %v456, %v455
      %v478 = vpack.c.b16 %v458, %v457
      %v479 = vpack.c.b16 %v460, %v459
      %v480 = vpack.c.b16 %v462, %v461
      %v481 = vpack.c.b16 %v464, %v463
      %v482 = vpack.c.b16 %v466, %v465
      %499 = vmatpush.bf16.msra.mxu0 %v401
      %500 = vmatpush.bf16.msra.mxu0 %v399
      %501 = vmatpush.bf16.msra.mxu0 %v397
      %502 = vmatpush.bf16.msra.mxu0 %v395
      %503 = vmatpush.bf16.msra.mxu0 %v393
      %504 = vmatpush.bf16.msra.mxu0 %v391
      %505 = vmatpush.bf16.msra.mxu0 %v389
      %506 = vmatpush.bf16.msra.mxu0 %v387
      %507 = vmatmul.bf16.gmra.mxu0 %v467
      %v508 = vpop.f32.mrf.mxu0
      %v509 = vadd.f32 0.0, %v508
      %v510 = vpop.f32.mrf.mxu0
      %v511 = vadd.f32 0.0, %v510
      %512 = vmatmul.bf16.gmra.mxu0 %v468
      %v513 = vpop.f32.mrf.mxu0
      %v514 = vadd.f32 0.0, %v513
      %v515 = vpop.f32.mrf.mxu0
      %v516 = vadd.f32 0.0, %v515
      %517 = vmatmul.bf16.gmra.mxu0 %v469
      %v518 = vpop.f32.mrf.mxu0
      %v519 = vadd.f32 0.0, %v518
      %v520 = vpop.f32.mrf.mxu0
      %v521 = vadd.f32 0.0, %v520
      %522 = vmatmul.bf16.gmra.mxu0 %v470
      %v523 = vpop.f32.mrf.mxu0
      %v524 = vadd.f32 0.0, %v523
      %v525 = vpop.f32.mrf.mxu0
      %v526 = vadd.f32 0.0, %v525
      %527 = vmatmul.bf16.gmra.mxu0 %v471
      %v528 = vpop.f32.mrf.mxu0
      %v529 = vadd.f32 0.0, %v528
      %v530 = vpop.f32.mrf.mxu0
      %v531 = vadd.f32 0.0, %v530
      %532 = vmatmul.bf16.gmra.mxu0 %v472
      %v533 = vpop.f32.mrf.mxu0
      %v534 = vadd.f32 0.0, %v533
      %v535 = vpop.f32.mrf.mxu0
      %v536 = vadd.f32 0.0, %v535
      %537 = vmatmul.bf16.gmra.mxu0 %v473
      %v538 = vpop.f32.mrf.mxu0
      %v539 = vadd.f32 0.0, %v538
      %v540 = vpop.f32.mrf.mxu0
      %v541 = vadd.f32 0.0, %v540
      %542 = vmatmul.bf16.gmra.mxu0 %v474
      %v543 = vpop.f32.mrf.mxu0
      %v544 = vadd.f32 0.0, %v543
      %v545 = vpop.f32.mrf.mxu0
      %v546 = vadd.f32 0.0, %v545
      %547 = vmatmul.bf16.gmra.mxu0 %v475
      %v548 = vpop.f32.mrf.mxu0
      %v549 = vadd.f32 0.0, %v548
      %v550 = vpop.f32.mrf.mxu0
      %v551 = vadd.f32 0.0, %v550
      %552 = vmatmul.bf16.gmra.mxu0 %v476
      %v553 = vpop.f32.mrf.mxu0
      %v554 = vadd.f32 0.0, %v553
      %v555 = vpop.f32.mrf.mxu0
      %v556 = vadd.f32 0.0, %v555
      %557 = vmatmul.bf16.gmra.mxu0 %v477
      %v558 = vpop.f32.mrf.mxu0
      %v559 = vadd.f32 0.0, %v558
      %v560 = vpop.f32.mrf.mxu0
      %v561 = vadd.f32 0.0, %v560
      %562 = vmatmul.bf16.gmra.mxu0 %v478
      %v563 = vpop.f32.mrf.mxu0
      %v564 = vadd.f32 0.0, %v563
      %v565 = vpop.f32.mrf.mxu0
      %v566 = vadd.f32 0.0, %v565
      %567 = vmatmul.bf16.gmra.mxu0 %v479
      %v568 = vpop.f32.mrf.mxu0
      %v569 = vadd.f32 0.0, %v568
      %v570 = vpop.f32.mrf.mxu0
      %v571 = vadd.f32 0.0, %v570
      %572 = vmatmul.bf16.gmra.mxu0 %v480
      %v573 = vpop.f32.mrf.mxu0
      %v574 = vadd.f32 0.0, %v573
      %v575 = vpop.f32.mrf.mxu0
      %v576 = vadd.f32 0.0, %v575
      %577 = vmatmul.bf16.gmra.mxu0 %v481
      %v578 = vpop.f32.mrf.mxu0
      %v579 = vadd.f32 0.0, %v578
      %v580 = vpop.f32.mrf.mxu0
      %v581 = vadd.f32 0.0, %v580
      %582 = vmatmul.bf16.gmra.mxu0 %v482
      %v583 = vpop.f32.mrf.mxu0
      %v584 = vadd.f32 0.0, %v583
      %v585 = vpop.f32.mrf.mxu0
      %v586 = vadd.f32 0.0, %v585
      %587 = vdwg.mxu0
      %588 = vmatpush.bf16.msra.mxu0 %v402
      %589 = vmatpush.bf16.msra.mxu0 %v400
      %590 = vmatpush.bf16.msra.mxu0 %v398
      %591 = vmatpush.bf16.msra.mxu0 %v396
      %592 = vmatpush.bf16.msra.mxu0 %v394
      %593 = vmatpush.bf16.msra.mxu0 %v392
      %594 = vmatpush.bf16.msra.mxu0 %v390
      %595 = vmatpush.bf16.msra.mxu0 %v388
      %596 = vmatmul.bf16.gmra.mxu0 %v467
      %v597 = vpop.f32.mrf.mxu0
      %v598 = vadd.f32 0.0, %v597
      %v599 = vpop.f32.mrf.mxu0
      %v600 = vadd.f32 0.0, %v599
      %601 = vmatmul.bf16.gmra.mxu0 %v468
      %v602 = vpop.f32.mrf.mxu0
      %v603 = vadd.f32 0.0, %v602
      %v604 = vpop.f32.mrf.mxu0
      %v605 = vadd.f32 0.0, %v604
      %606 = vmatmul.bf16.gmra.mxu0 %v469
      %v607 = vpop.f32.mrf.mxu0
      %v608 = vadd.f32 0.0, %v607
      %v609 = vpop.f32.mrf.mxu0
      %v610 = vadd.f32 0.0, %v609
      %611 = vmatmul.bf16.gmra.mxu0 %v470
      %v612 = vpop.f32.mrf.mxu0
      %v613 = vadd.f32 0.0, %v612
      %v614 = vpop.f32.mrf.mxu0
      %v615 = vadd.f32 0.0, %v614
      %616 = vmatmul.bf16.gmra.mxu0 %v471
      %v617 = vpop.f32.mrf.mxu0
      %v618 = vadd.f32 0.0, %v617
      %v619 = vpop.f32.mrf.mxu0
      %v620 = vadd.f32 0.0, %v619
      %621 = vmatmul.bf16.gmra.mxu0 %v472
      %v622 = vpop.f32.mrf.mxu0
      %v623 = vadd.f32 0.0, %v622
      %v624 = vpop.f32.mrf.mxu0
      %v625 = vadd.f32 0.0, %v624
      %626 = vmatmul.bf16.gmra.mxu0 %v473
      %v627 = vpop.f32.mrf.mxu0
      %v628 = vadd.f32 0.0, %v627
      %v629 = vpop.f32.mrf.mxu0
      %v630 = vadd.f32 0.0, %v629
      %631 = vmatmul.bf16.gmra.mxu0 %v474
      %v632 = vpop.f32.mrf.mxu0
      %v633 = vadd.f32 0.0, %v632
      %v634 = vpop.f32.mrf.mxu0
      %v635 = vadd.f32 0.0, %v634
      %636 = vmatmul.bf16.gmra.mxu0 %v475
      %v637 = vpop.f32.mrf.mxu0
      %v638 = vadd.f32 0.0, %v637
      %v639 = vpop.f32.mrf.mxu0
      %v640 = vadd.f32 0.0, %v639
      %641 = vmatmul.bf16.gmra.mxu0 %v476
      %v642 = vpop.f32.mrf.mxu0
      %v643 = vadd.f32 0.0, %v642
      %v644 = vpop.f32.mrf.mxu0
      %v645 = vadd.f32 0.0, %v644
      %646 = vmatmul.bf16.gmra.mxu0 %v477
      %v647 = vpop.f32.mrf.mxu0
      %v648 = vadd.f32 0.0, %v647
      %v649 = vpop.f32.mrf.mxu0
      %v650 = vadd.f32 0.0, %v649
      %651 = vmatmul.bf16.gmra.mxu0 %v478
      %v652 = vpop.f32.mrf.mxu0
      %v653 = vadd.f32 0.0, %v652
      %v654 = vpop.f32.mrf.mxu0
      %v655 = vadd.f32 0.0, %v654
      %656 = vmatmul.bf16.gmra.mxu0 %v479
      %v657 = vpop.f32.mrf.mxu0
      %v658 = vadd.f32 0.0, %v657
      %v659 = vpop.f32.mrf.mxu0
      %v660 = vadd.f32 0.0, %v659
      %661 = vmatmul.bf16.gmra.mxu0 %v480
      %v662 = vpop.f32.mrf.mxu0
      %v663 = vadd.f32 0.0, %v662
      %v664 = vpop.f32.mrf.mxu0
      %v665 = vadd.f32 0.0, %v664
      %666 = vmatmul.bf16.gmra.mxu0 %v481
      %v667 = vpop.f32.mrf.mxu0
      %v668 = vadd.f32 0.0, %v667
      %v669 = vpop.f32.mrf.mxu0
      %v670 = vadd.f32 0.0, %v669
      %671 = vmatmul.bf16.gmra.mxu0 %v482
      %v672 = vpop.f32.mrf.mxu0
      %v673 = vadd.f32 0.0, %v672
      %v674 = vpop.f32.mrf.mxu0
      %v675 = vadd.f32 0.0, %v674
      %676 = vdwg.mxu0
      %v677 = vld [vmem:[%s299] sm:$0xff]
      %v678 = vld [vmem:[%s299 + $0x8] sm:$0xff]
      %v679 = vld [vmem:[%s299 + $0x10] sm:$0xff]
      %v680 = vld [vmem:[%s299 + $0x18] sm:$0xff]
      %v681 = vld [vmem:[%s299 + $0x20] sm:$0xff]
      %v682 = vld [vmem:[%s299 + $0x28] sm:$0xff]
      %v683 = vld [vmem:[%s299 + $0x30] sm:$0xff]
      %v684 = vld [vmem:[%s299 + $0x38] sm:$0xff]
      %v685 = vld [vmem:[%s299 + $0x40] sm:$0xff]
      %v686 = vld [vmem:[%s299 + $0x48] sm:$0xff]
      %v687 = vld [vmem:[%s299 + $0x50] sm:$0xff]
      %v688 = vld [vmem:[%s299 + $0x58] sm:$0xff]
      %v689 = vld [vmem:[%s299 + $0x60] sm:$0xff]
      %v690 = vld [vmem:[%s299 + $0x68] sm:$0xff]
      %v691 = vld [vmem:[%s299 + $0x70] sm:$0xff]
      %v692 = vld [vmem:[%s299 + $0x78] sm:$0xff]
      %v693 = vld [vmem:[%s299 + $0x80] sm:$0xff]
      %v694 = vld [vmem:[%s299 + $0x88] sm:$0xff]
      %v695 = vld [vmem:[%s299 + $0x90] sm:$0xff]
      %v696 = vld [vmem:[%s299 + $0x98] sm:$0xff]
      %v697 = vld [vmem:[%s299 + $0xa0] sm:$0xff]
      %v698 = vld [vmem:[%s299 + $0xa8] sm:$0xff]
      %v699 = vld [vmem:[%s299 + $0xb0] sm:$0xff]
      %v700 = vld [vmem:[%s299 + $0xb8] sm:$0xff]
      %v701 = vld [vmem:[%s299 + $0xc0] sm:$0xff]
      %v702 = vld [vmem:[%s299 + $0xc8] sm:$0xff]
      %v703 = vld [vmem:[%s299 + $0xd0] sm:$0xff]
      %v704 = vld [vmem:[%s299 + $0xd8] sm:$0xff]
      %v705 = vld [vmem:[%s299 + $0xe0] sm:$0xff]
      %v706 = vld [vmem:[%s299 + $0xe8] sm:$0xff]
      %v707 = vld [vmem:[%s299 + $0xf0] sm:$0xff]
      %v708 = vld [vmem:[%s299 + $0xf8] sm:$0xff]
      %710 = vset.pattern.permute.xlu0 0
      %711 = vperm.xlu0 %710, %v677
      %v712 = vpop.permute.xlu0 %711
      %715 = vset.pattern.permute.xlu0 0
      %716 = vperm.xlu0 %715, %v678
      %v717 = vpop.permute.xlu0 %716
      %720 = vset.pattern.permute.xlu0 0
      %721 = vperm.xlu0 %720, %v679
      %v722 = vpop.permute.xlu0 %721
      %725 = vset.pattern.permute.xlu0 0
      %726 = vperm.xlu0 %725, %v680
      %v727 = vpop.permute.xlu0 %726
      %730 = vset.pattern.permute.xlu0 0
      %731 = vperm.xlu0 %730, %v681
      %v732 = vpop.permute.xlu0 %731
      %735 = vset.pattern.permute.xlu0 0
      %736 = vperm.xlu0 %735, %v682
      %v737 = vpop.permute.xlu0 %736
      %740 = vset.pattern.permute.xlu0 0
      %741 = vperm.xlu0 %740, %v683
      %v742 = vpop.permute.xlu0 %741
      %745 = vset.pattern.permute.xlu0 0
      %746 = vperm.xlu0 %745, %v684
      %v747 = vpop.permute.xlu0 %746
      %750 = vset.pattern.permute.xlu0 0
      %751 = vperm.xlu0 %750, %v685
      %v752 = vpop.permute.xlu0 %751
      %755 = vset.pattern.permute.xlu0 0
      %756 = vperm.xlu0 %755, %v686
      %v757 = vpop.permute.xlu0 %756
      %760 = vset.pattern.permute.xlu0 0
      %761 = vperm.xlu0 %760, %v687
      %v762 = vpop.permute.xlu0 %761
      %765 = vset.pattern.permute.xlu0 0
      %766 = vperm.xlu0 %765, %v688
      %v767 = vpop.permute.xlu0 %766
      %770 = vset.pattern.permute.xlu0 0
      %771 = vperm.xlu0 %770, %v689
      %v772 = vpop.permute.xlu0 %771
      %775 = vset.pattern.permute.xlu0 0
      %776 = vperm.xlu0 %775, %v690
      %v777 = vpop.permute.xlu0 %776
      %780 = vset.pattern.permute.xlu0 0
      %781 = vperm.xlu0 %780, %v691
      %v782 = vpop.permute.xlu0 %781
      %785 = vset.pattern.permute.xlu0 0
      %786 = vperm.xlu0 %785, %v692
      %v787 = vpop.permute.xlu0 %786
      %790 = vset.pattern.permute.xlu0 0
      %791 = vperm.xlu0 %790, %v693
      %v792 = vpop.permute.xlu0 %791
      %795 = vset.pattern.permute.xlu0 0
      %796 = vperm.xlu0 %795, %v694
      %v797 = vpop.permute.xlu0 %796
      %800 = vset.pattern.permute.xlu0 0
      %801 = vperm.xlu0 %800, %v695
      %v802 = vpop.permute.xlu0 %801
      %805 = vset.pattern.permute.xlu0 0
      %806 = vperm.xlu0 %805, %v696
      %v807 = vpop.permute.xlu0 %806
      %810 = vset.pattern.permute.xlu0 0
      %811 = vperm.xlu0 %810, %v697
      %v812 = vpop.permute.xlu0 %811
      %815 = vset.pattern.permute.xlu0 0
      %816 = vperm.xlu0 %815, %v698
      %v817 = vpop.permute.xlu0 %816
      %820 = vset.pattern.permute.xlu0 0
      %821 = vperm.xlu0 %820, %v699
      %v822 = vpop.permute.xlu0 %821
      %825 = vset.pattern.permute.xlu0 0
      %826 = vperm.xlu0 %825, %v700
      %v827 = vpop.permute.xlu0 %826
      %830 = vset.pattern.permute.xlu0 0
      %831 = vperm.xlu0 %830, %v701
      %v832 = vpop.permute.xlu0 %831
      %835 = vset.pattern.permute.xlu0 0
      %836 = vperm.xlu0 %835, %v702
      %v837 = vpop.permute.xlu0 %836
      %840 = vset.pattern.permute.xlu0 0
      %841 = vperm.xlu0 %840, %v703
      %v842 = vpop.permute.xlu0 %841
      %845 = vset.pattern.permute.xlu0 0
      %846 = vperm.xlu0 %845, %v704
      %v847 = vpop.permute.xlu0 %846
      %850 = vset.pattern.permute.xlu0 0
      %851 = vperm.xlu0 %850, %v705
      %v852 = vpop.permute.xlu0 %851
      %855 = vset.pattern.permute.xlu0 0
      %856 = vperm.xlu0 %855, %v706
      %v857 = vpop.permute.xlu0 %856
      %860 = vset.pattern.permute.xlu0 0
      %861 = vperm.xlu0 %860, %v707
      %v862 = vpop.permute.xlu0 %861
      %865 = vset.pattern.permute.xlu0 0
      %866 = vperm.xlu0 %865, %v708
      %v867 = vpop.permute.xlu0 %866
      %v869 = vmul.f32 %v509, %v712
      %v870 = vmul.f32 %v598, %v712
      %v871 = vmul.f32 %v511, %v717
      %v872 = vmul.f32 %v600, %v717
      %v873 = vmul.f32 %v514, %v722
      %v874 = vmul.f32 %v603, %v722
      %v875 = vmul.f32 %v516, %v727
      %v876 = vmul.f32 %v605, %v727
      %v877 = vmul.f32 %v519, %v732
      %v878 = vmul.f32 %v608, %v732
      %v879 = vmul.f32 %v521, %v737
      %v880 = vmul.f32 %v610, %v737
      %v881 = vmul.f32 %v524, %v742
      %v882 = vmul.f32 %v613, %v742
      %v883 = vmul.f32 %v526, %v747
      %v884 = vmul.f32 %v615, %v747
      %v885 = vmul.f32 %v529, %v752
      %v886 = vmul.f32 %v618, %v752
      %v887 = vmul.f32 %v531, %v757
      %v888 = vmul.f32 %v620, %v757
      %v889 = vmul.f32 %v534, %v762
      %v890 = vmul.f32 %v623, %v762
      %v891 = vmul.f32 %v536, %v767
      %v892 = vmul.f32 %v625, %v767
      %v893 = vmul.f32 %v539, %v772
      %v894 = vmul.f32 %v628, %v772
      %v895 = vmul.f32 %v541, %v777
      %v896 = vmul.f32 %v630, %v777
      %v897 = vmul.f32 %v544, %v782
      %v898 = vmul.f32 %v633, %v782
      %v899 = vmul.f32 %v546, %v787
      %v900 = vmul.f32 %v635, %v787
      %v901 = vmul.f32 %v549, %v792
      %v902 = vmul.f32 %v638, %v792
      %v903 = vmul.f32 %v551, %v797
      %v904 = vmul.f32 %v640, %v797
      %v905 = vmul.f32 %v554, %v802
      %v906 = vmul.f32 %v643, %v802
      %v907 = vmul.f32 %v556, %v807
      %v908 = vmul.f32 %v645, %v807
      %v909 = vmul.f32 %v559, %v812
      %v910 = vmul.f32 %v648, %v812
      %v911 = vmul.f32 %v561, %v817
      %v912 = vmul.f32 %v650, %v817
      %v913 = vmul.f32 %v564, %v822
      %v914 = vmul.f32 %v653, %v822
      %v915 = vmul.f32 %v566, %v827
      %v916 = vmul.f32 %v655, %v827
      %v917 = vmul.f32 %v569, %v832
      %v918 = vmul.f32 %v658, %v832
      %v919 = vmul.f32 %v571, %v837
      %v920 = vmul.f32 %v660, %v837
      %v921 = vmul.f32 %v574, %v842
      %v922 = vmul.f32 %v663, %v842
      %v923 = vmul.f32 %v576, %v847
      %v924 = vmul.f32 %v665, %v847
      %v925 = vmul.f32 %v579, %v852
      %v926 = vmul.f32 %v668, %v852
      %v927 = vmul.f32 %v581, %v857
      %v928 = vmul.f32 %v670, %v857
      %v929 = vmul.f32 %v584, %v862
      %v930 = vmul.f32 %v673, %v862
      %v931 = vmul.f32 %v586, %v867
      %v932 = vmul.f32 %v675, %v867
      %v933 = vld [vmem:[%s305] sm:$0xff]
      %v934 = vld [vmem:[%s305 + $0x8] sm:$0xff]
      %v935 = vld [vmem:[%s305 + $0x10] sm:$0xff]
      %v936 = vld [vmem:[%s305 + $0x18] sm:$0xff]
      %v937 = vld [vmem:[%s305 + $0x20] sm:$0xff]
      %v938 = vld [vmem:[%s305 + $0x28] sm:$0xff]
      %v939 = vld [vmem:[%s305 + $0x30] sm:$0xff]
      %v940 = vld [vmem:[%s305 + $0x38] sm:$0xff]
      %v941 = vld [vmem:[%s305 + $0x40] sm:$0xff]
      %v942 = vld [vmem:[%s305 + $0x48] sm:$0xff]
      %v943 = vld [vmem:[%s305 + $0x50] sm:$0xff]
      %v944 = vld [vmem:[%s305 + $0x58] sm:$0xff]
      %v945 = vld [vmem:[%s305 + $0x60] sm:$0xff]
      %v946 = vld [vmem:[%s305 + $0x68] sm:$0xff]
      %v947 = vld [vmem:[%s305 + $0x70] sm:$0xff]
      %v948 = vld [vmem:[%s305 + $0x78] sm:$0xff]
      %v949 = vld [vmem:[%s305 + $0x80] sm:$0xff]
      %v950 = vld [vmem:[%s305 + $0x88] sm:$0xff]
      %v951 = vld [vmem:[%s305 + $0x90] sm:$0xff]
      %v952 = vld [vmem:[%s305 + $0x98] sm:$0xff]
      %v953 = vld [vmem:[%s305 + $0xa0] sm:$0xff]
      %v954 = vld [vmem:[%s305 + $0xa8] sm:$0xff]
      %v955 = vld [vmem:[%s305 + $0xb0] sm:$0xff]
      %v956 = vld [vmem:[%s305 + $0xb8] sm:$0xff]
      %v957 = vld [vmem:[%s305 + $0xc0] sm:$0xff]
      %v958 = vld [vmem:[%s305 + $0xc8] sm:$0xff]
      %v959 = vld [vmem:[%s305 + $0xd0] sm:$0xff]
      %v960 = vld [vmem:[%s305 + $0xd8] sm:$0xff]
      %v961 = vld [vmem:[%s305 + $0xe0] sm:$0xff]
      %v962 = vld [vmem:[%s305 + $0xe8] sm:$0xff]
      %v963 = vld [vmem:[%s305 + $0xf0] sm:$0xff]
      %v964 = vld [vmem:[%s305 + $0xf8] sm:$0xff]
      %966 = vset.pattern.permute.xlu0 0
      %967 = vperm.xlu0 %966, %v933
      %v968 = vpop.permute.xlu0 %967
      %971 = vset.pattern.permute.xlu0 0
      %972 = vperm.xlu0 %971, %v934
      %v973 = vpop.permute.xlu0 %972
      %976 = vset.pattern.permute.xlu0 0
      %977 = vperm.xlu0 %976, %v935
      %v978 = vpop.permute.xlu0 %977
      %981 = vset.pattern.permute.xlu0 0
      %982 = vperm.xlu0 %981, %v936
      %v983 = vpop.permute.xlu0 %982
      %986 = vset.pattern.permute.xlu0 0
      %987 = vperm.xlu0 %986, %v937
      %v988 = vpop.permute.xlu0 %987
      %991 = vset.pattern.permute.xlu0 0
      %992 = vperm.xlu0 %991, %v938
      %v993 = vpop.permute.xlu0 %992
      %996 = vset.pattern.permute.xlu0 0
      %997 = vperm.xlu0 %996, %v939
      %v998 = vpop.permute.xlu0 %997
      %1001 = vset.pattern.permute.xlu0 0
      %1002 = vperm.xlu0 %1001, %v940
      %v1003 = vpop.permute.xlu0 %1002
      %1006 = vset.pattern.permute.xlu0 0
      %1007 = vperm.xlu0 %1006, %v941
      %v1008 = vpop.permute.xlu0 %1007
      %1011 = vset.pattern.permute.xlu0 0
      %1012 = vperm.xlu0 %1011, %v942
      %v1013 = vpop.permute.xlu0 %1012
      %1016 = vset.pattern.permute.xlu0 0
      %1017 = vperm.xlu0 %1016, %v943
      %v1018 = vpop.permute.xlu0 %1017
      %1021 = vset.pattern.permute.xlu0 0
      %1022 = vperm.xlu0 %1021, %v944
      %v1023 = vpop.permute.xlu0 %1022
      %1026 = vset.pattern.permute.xlu0 0
      %1027 = vperm.xlu0 %1026, %v945
      %v1028 = vpop.permute.xlu0 %1027
      %1031 = vset.pattern.permute.xlu0 0
      %1032 = vperm.xlu0 %1031, %v946
      %v1033 = vpop.permute.xlu0 %1032
      %1036 = vset.pattern.permute.xlu0 0
      %1037 = vperm.xlu0 %1036, %v947
      %v1038 = vpop.permute.xlu0 %1037
      %1041 = vset.pattern.permute.xlu0 0
      %1042 = vperm.xlu0 %1041, %v948
      %v1043 = vpop.permute.xlu0 %1042
      %1046 = vset.pattern.permute.xlu0 0
      %1047 = vperm.xlu0 %1046, %v949
      %v1048 = vpop.permute.xlu0 %1047
      %1051 = vset.pattern.permute.xlu0 0
      %1052 = vperm.xlu0 %1051, %v950
      %v1053 = vpop.permute.xlu0 %1052
      %1056 = vset.pattern.permute.xlu0 0
      %1057 = vperm.xlu0 %1056, %v951
      %v1058 = vpop.permute.xlu0 %1057
      %1061 = vset.pattern.permute.xlu0 0
      %1062 = vperm.xlu0 %1061, %v952
      %v1063 = vpop.permute.xlu0 %1062
      %1066 = vset.pattern.permute.xlu0 0
      %1067 = vperm.xlu0 %1066, %v953
      %v1068 = vpop.permute.xlu0 %1067
      %1071 = vset.pattern.permute.xlu0 0
      %1072 = vperm.xlu0 %1071, %v954
      %v1073 = vpop.permute.xlu0 %1072
      %1076 = vset.pattern.permute.xlu0 0
      %1077 = vperm.xlu0 %1076, %v955
      %v1078 = vpop.permute.xlu0 %1077
      %1081 = vset.pattern.permute.xlu0 0
      %1082 = vperm.xlu0 %1081, %v956
      %v1083 = vpop.permute.xlu0 %1082
      %1086 = vset.pattern.permute.xlu0 0
      %1087 = vperm.xlu0 %1086, %v957
      %v1088 = vpop.permute.xlu0 %1087
      %1091 = vset.pattern.permute.xlu0 0
      %1092 = vperm.xlu0 %1091, %v958
      %v1093 = vpop.permute.xlu0 %1092
      %1096 = vset.pattern.permute.xlu0 0
      %1097 = vperm.xlu0 %1096, %v959
      %v1098 = vpop.permute.xlu0 %1097
      %1101 = vset.pattern.permute.xlu0 0
      %1102 = vperm.xlu0 %1101, %v960
      %v1103 = vpop.permute.xlu0 %1102
      %1106 = vset.pattern.permute.xlu0 0
      %1107 = vperm.xlu0 %1106, %v961
      %v1108 = vpop.permute.xlu0 %1107
      %1111 = vset.pattern.permute.xlu0 0
      %1112 = vperm.xlu0 %1111, %v962
      %v1113 = vpop.permute.xlu0 %1112
      %1116 = vset.pattern.permute.xlu0 0
      %1117 = vperm.xlu0 %1116, %v963
      %v1118 = vpop.permute.xlu0 %1117
      %1121 = vset.pattern.permute.xlu0 0
      %1122 = vperm.xlu0 %1121, %v964
      %v1123 = vpop.permute.xlu0 %1122
      %v1125 = vadd.f32 %v869, %v968
      %v1126 = vadd.f32 %v870, %v968
      %v1127 = vadd.f32 %v871, %v973
      %v1128 = vadd.f32 %v872, %v973
      %v1129 = vadd.f32 %v873, %v978
      %v1130 = vadd.f32 %v874, %v978
      %v1131 = vadd.f32 %v875, %v983
      %v1132 = vadd.f32 %v876, %v983
      %v1133 = vadd.f32 %v877, %v988
      %v1134 = vadd.f32 %v878, %v988
      %v1135 = vadd.f32 %v879, %v993
      %v1136 = vadd.f32 %v880, %v993
      %v1137 = vadd.f32 %v881, %v998
      %v1138 = vadd.f32 %v882, %v998
      %v1139 = vadd.f32 %v883, %v1003
      %v1140 = vadd.f32 %v884, %v1003
      %v1141 = vadd.f32 %v885, %v1008
      %v1142 = vadd.f32 %v886, %v1008
      %v1143 = vadd.f32 %v887, %v1013
      %v1144 = vadd.f32 %v888, %v1013
      %v1145 = vadd.f32 %v889, %v1018
      %v1146 = vadd.f32 %v890, %v1018
      %v1147 = vadd.f32 %v891, %v1023
      %v1148 = vadd.f32 %v892, %v1023
      %v1149 = vadd.f32 %v893, %v1028
      %v1150 = vadd.f32 %v894, %v1028
      %v1151 = vadd.f32 %v895, %v1033
      %v1152 = vadd.f32 %v896, %v1033
      %v1153 = vadd.f32 %v897, %v1038
      %v1154 = vadd.f32 %v898, %v1038
      %v1155 = vadd.f32 %v899, %v1043
      %v1156 = vadd.f32 %v900, %v1043
      %v1157 = vadd.f32 %v901, %v1048
      %v1158 = vadd.f32 %v902, %v1048
      %v1159 = vadd.f32 %v903, %v1053
      %v1160 = vadd.f32 %v904, %v1053
      %v1161 = vadd.f32 %v905, %v1058
      %v1162 = vadd.f32 %v906, %v1058
      %v1163 = vadd.f32 %v907, %v1063
      %v1164 = vadd.f32 %v908, %v1063
      %v1165 = vadd.f32 %v909, %v1068
      %v1166 = vadd.f32 %v910, %v1068
      %v1167 = vadd.f32 %v911, %v1073
      %v1168 = vadd.f32 %v912, %v1073
      %v1169 = vadd.f32 %v913, %v1078
      %v1170 = vadd.f32 %v914, %v1078
      %v1171 = vadd.f32 %v915, %v1083
      %v1172 = vadd.f32 %v916, %v1083
      %v1173 = vadd.f32 %v917, %v1088
      %v1174 = vadd.f32 %v918, %v1088
      %v1175 = vadd.f32 %v919, %v1093
      %v1176 = vadd.f32 %v920, %v1093
      %v1177 = vadd.f32 %v921, %v1098
      %v1178 = vadd.f32 %v922, %v1098
      %v1179 = vadd.f32 %v923, %v1103
      %v1180 = vadd.f32 %v924, %v1103
      %v1181 = vadd.f32 %v925, %v1108
      %v1182 = vadd.f32 %v926, %v1108
      %v1183 = vadd.f32 %v927, %v1113
      %v1184 = vadd.f32 %v928, %v1113
      %v1185 = vadd.f32 %v929, %v1118
      %v1186 = vadd.f32 %v930, %v1118
      %v1187 = vadd.f32 %v931, %v1123
      %v1188 = vadd.f32 %v932, %v1123
      %v1189 = vmax.f32 %v1125, 0.0
      %v1190 = vmax.f32 %v1126, 0.0
      %v1191 = vmax.f32 %v1127, 0.0
      %v1192 = vmax.f32 %v1128, 0.0
      %v1193 = vmax.f32 %v1129, 0.0
      %v1194 = vmax.f32 %v1130, 0.0
      %v1195 = vmax.f32 %v1131, 0.0
      %v1196 = vmax.f32 %v1132, 0.0
      %v1197 = vmax.f32 %v1133, 0.0
      %v1198 = vmax.f32 %v1134, 0.0
      %v1199 = vmax.f32 %v1135, 0.0
      %v1200 = vmax.f32 %v1136, 0.0
      %v1201 = vmax.f32 %v1137, 0.0
      %v1202 = vmax.f32 %v1138, 0.0
      %v1203 = vmax.f32 %v1139, 0.0
      %v1204 = vmax.f32 %v1140, 0.0
      %v1205 = vmax.f32 %v1141, 0.0
      %v1206 = vmax.f32 %v1142, 0.0
      %v1207 = vmax.f32 %v1143, 0.0
      %v1208 = vmax.f32 %v1144, 0.0
      %v1209 = vmax.f32 %v1145, 0.0
      %v1210 = vmax.f32 %v1146, 0.0
      %v1211 = vmax.f32 %v1147, 0.0
      %v1212 = vmax.f32 %v1148, 0.0
      %v1213 = vmax.f32 %v1149, 0.0
      %v1214 = vmax.f32 %v1150, 0.0
      %v1215 = vmax.f32 %v1151, 0.0
      %v1216 = vmax.f32 %v1152, 0.0
      %v1217 = vmax.f32 %v1153, 0.0
      %v1218 = vmax.f32 %v1154, 0.0
      %v1219 = vmax.f32 %v1155, 0.0
      %v1220 = vmax.f32 %v1156, 0.0
      %v1221 = vmax.f32 %v1157, 0.0
      %v1222 = vmax.f32 %v1158, 0.0
      %v1223 = vmax.f32 %v1159, 0.0
      %v1224 = vmax.f32 %v1160, 0.0
      %v1225 = vmax.f32 %v1161, 0.0
      %v1226 = vmax.f32 %v1162, 0.0
      %v1227 = vmax.f32 %v1163, 0.0
      %v1228 = vmax.f32 %v1164, 0.0
      %v1229 = vmax.f32 %v1165, 0.0
      %v1230 = vmax.f32 %v1166, 0.0
      %v1231 = vmax.f32 %v1167, 0.0
      %v1232 = vmax.f32 %v1168, 0.0
      %v1233 = vmax.f32 %v1169, 0.0
      %v1234 = vmax.f32 %v1170, 0.0
      %v1235 = vmax.f32 %v1171, 0.0
      %v1236 = vmax.f32 %v1172, 0.0
      %v1237 = vmax.f32 %v1173, 0.0
      %v1238 = vmax.f32 %v1174, 0.0
      %v1239 = vmax.f32 %v1175, 0.0
      %v1240 = vmax.f32 %v1176, 0.0
      %v1241 = vmax.f32 %v1177, 0.0
      %v1242 = vmax.f32 %v1178, 0.0
      %v1243 = vmax.f32 %v1179, 0.0
      %v1244 = vmax.f32 %v1180, 0.0
      %v1245 = vmax.f32 %v1181, 0.0
      %v1246 = vmax.f32 %v1182, 0.0
      %v1247 = vmax.f32 %v1183, 0.0
      %v1248 = vmax.f32 %v1184, 0.0
      %v1249 = vmax.f32 %v1185, 0.0
      %v1250 = vmax.f32 %v1186, 0.0
      %v1251 = vmax.f32 %v1187, 0.0
      %v1252 = vmax.f32 %v1188, 0.0
      %1253 = vst [vmem:[%s320] sm:$0xff] %v1189
      %1254 = vst [vmem:[%s320 + $0x8] sm:$0xff] %v1190
      %1255 = vst [vmem:[%s320 + $0x10] sm:$0xff] %v1191
      %1256 = vst [vmem:[%s320 + $0x18] sm:$0xff] %v1192
      %1257 = vst [vmem:[%s320 + $0x20] sm:$0xff] %v1193
      %1258 = vst [vmem:[%s320 + $0x28] sm:$0xff] %v1194
      %1259 = vst [vmem:[%s320 + $0x30] sm:$0xff] %v1195
      %1260 = vst [vmem:[%s320 + $0x38] sm:$0xff] %v1196
      %1261 = vst [vmem:[%s320 + $0x40] sm:$0xff] %v1197
      %1262 = vst [vmem:[%s320 + $0x48] sm:$0xff] %v1198
      %1263 = vst [vmem:[%s320 + $0x50] sm:$0xff] %v1199
      %1264 = vst [vmem:[%s320 + $0x58] sm:$0xff] %v1200
      %1265 = vst [vmem:[%s320 + $0x60] sm:$0xff] %v1201
      %1266 = vst [vmem:[%s320 + $0x68] sm:$0xff] %v1202
      %1267 = vst [vmem:[%s320 + $0x70] sm:$0xff] %v1203
      %1268 = vst [vmem:[%s320 + $0x78] sm:$0xff] %v1204
      %1269 = vst [vmem:[%s320 + $0x80] sm:$0xff] %v1205
      %1270 = vst [vmem:[%s320 + $0x88] sm:$0xff] %v1206
      %1271 = vst [vmem:[%s320 + $0x90] sm:$0xff] %v1207
      %1272 = vst [vmem:[%s320 + $0x98] sm:$0xff] %v1208
      %1273 = vst [vmem:[%s320 + $0xa0] sm:$0xff] %v1209
      %1274 = vst [vmem:[%s320 + $0xa8] sm:$0xff] %v1210
      %1275 = vst [vmem:[%s320 + $0xb0] sm:$0xff] %v1211
      %1276 = vst [vmem:[%s320 + $0xb8] sm:$0xff] %v1212
      %1277 = vst [vmem:[%s320 + $0xc0] sm:$0xff] %v1213
      %1278 = vst [vmem:[%s320 + $0xc8] sm:$0xff] %v1214
      %1279 = vst [vmem:[%s320 + $0xd0] sm:$0xff] %v1215
      %1280 = vst [vmem:[%s320 + $0xd8] sm:$0xff] %v1216
      %1281 = vst [vmem:[%s320 + $0xe0] sm:$0xff] %v1217
      %1282 = vst [vmem:[%s320 + $0xe8] sm:$0xff] %v1218
      %1283 = vst [vmem:[%s320 + $0xf0] sm:$0xff] %v1219
      %1284 = vst [vmem:[%s320 + $0xf8] sm:$0xff] %v1220
      %1285 = vst [vmem:[%s320 + $0x100] sm:$0xff] %v1221
      %1286 = vst [vmem:[%s320 + $0x108] sm:$0xff] %v1222
      %1287 = vst [vmem:[%s320 + $0x110] sm:$0xff] %v1223
      %1288 = vst [vmem:[%s320 + $0x118] sm:$0xff] %v1224
      %1289 = vst [vmem:[%s320 + $0x120] sm:$0xff] %v1225
      %1290 = vst [vmem:[%s320 + $0x128] sm:$0xff] %v1226
      %1291 = vst [vmem:[%s320 + $0x130] sm:$0xff] %v1227
      %1292 = vst [vmem:[%s320 + $0x138] sm:$0xff] %v1228
      %1293 = vst [vmem:[%s320 + $0x140] sm:$0xff] %v1229
      %1294 = vst [vmem:[%s320 + $0x148] sm:$0xff] %v1230
      %1295 = vst [vmem:[%s320 + $0x150] sm:$0xff] %v1231
      %1296 = vst [vmem:[%s320 + $0x158] sm:$0xff] %v1232
      %1297 = vst [vmem:[%s320 + $0x160] sm:$0xff] %v1233
      %1298 = vst [vmem:[%s320 + $0x168] sm:$0xff] %v1234
      %1299 = vst [vmem:[%s320 + $0x170] sm:$0xff] %v1235
      %1300 = vst [vmem:[%s320 + $0x178] sm:$0xff] %v1236
      %1301 = vst [vmem:[%s320 + $0x180] sm:$0xff] %v1237
      %1302 = vst [vmem:[%s320 + $0x188] sm:$0xff] %v1238
      %1303 = vst [vmem:[%s320 + $0x190] sm:$0xff] %v1239
      %1304 = vst [vmem:[%s320 + $0x198] sm:$0xff] %v1240
      %1305 = vst [vmem:[%s320 + $0x1a0] sm:$0xff] %v1241
      %1306 = vst [vmem:[%s320 + $0x1a8] sm:$0xff] %v1242
      %1307 = vst [vmem:[%s320 + $0x1b0] sm:$0xff] %v1243
      %1308 = vst [vmem:[%s320 + $0x1b8] sm:$0xff] %v1244
      %1309 = vst [vmem:[%s320 + $0x1c0] sm:$0xff] %v1245
      %1310 = vst [vmem:[%s320 + $0x1c8] sm:$0xff] %v1246
      %1311 = vst [vmem:[%s320 + $0x1d0] sm:$0xff] %v1247
      %1312 = vst [vmem:[%s320 + $0x1d8] sm:$0xff] %v1248
      %1313 = vst [vmem:[%s320 + $0x1e0] sm:$0xff] %v1249
      %1314 = vst [vmem:[%s320 + $0x1e8] sm:$0xff] %v1250
      %1315 = vst [vmem:[%s320 + $0x1f0] sm:$0xff] %v1251
      %1316 = vst [vmem:[%s320 + $0x1f8] sm:$0xff] %v1252
      %s1317 = smul.u32 32, %s21
      %s1318 = smul.u32 2, %s22
      %p1319 = scmp.lt.s32.totalorder %s20, 1
      %s1320 = scalar_select %p1319, %s20, 1
      %p1321 = scmp.lt.s32.totalorder %s1317, 31
      %s1322 = scalar_select %p1321, %s1317, 31
      %p1323 = scmp.lt.s32.totalorder %s1318, 1
      %s1324 = scalar_select %p1323, %s1318, 1
      %s1325 = smul.addr %s1322, 2
      %s1326 = sadd.s32 %s1324, %s1325
      %s1327 = smul.addr %s1320, 64
      %s1328 = sadd.s32 %s1326, %s1327
      %s1329 = smul.addr %s1328, 8
      %s1330 = scalar_lea.vmem %s4, %s1329
      // Predicated region
      $region37: #{conv_block_forward.1} parent=35 // pred_check
        %p1331 = pneg %p162
      $region38: #{conv_block_forward.1} parent=35 // pred_check_branch
        %1333 = sbr.rel (%p1331) target = $region40
      $region39: #{conv_block_forward.1} parent=35 // pred_region
        %s1334 = smul.u32 32, %s21
        %s1335 = smul.u32 2, %s22
      $region40: #{conv_block_forward.1} parent=35 // pred_fallthru
        _
    $region36: #{conv_block_forward.1} parent=5 // pred_fallthru
      _
    %p1336 = scmp.le.s32.totalorder 2, %s10
    // Predicated region
    $region41: #{conv_block_forward.1} parent=5 // pred_check
      %p1337 = pneg %p1336
    $region42: #{conv_block_forward.1} parent=5 // pred_check_branch
      %1339 = sbr.rel (%p1337) target = $region44
    $region43: #{conv_block_forward.1} parent=5 // pred_region
      %s1340 = ssub.s32 %s10, 2
      // Predicated region
      $region45: #{conv_block_forward.1} parent=43 // pred_check
        %p1341 = pneg %p168
      $region46: #{conv_block_forward.1} parent=43 // pred_check_branch
        %1343 = sbr.rel (%p1341) target = $region48
      $region47: #{conv_block_forward.1} parent=43 // pred_region
        %s1344 = smul.u32 32, %s24
        %s1345 = smul.u32 2, %s25
        %p1346 = scmp.lt.s32.totalorder %s23, 1
        %s1347 = scalar_select %p1346, %s23, 1
        %p1348 = scmp.lt.s32.totalorder %s1344, 31
        %s1349 = scalar_select %p1348, %s1344, 31
        %p1350 = scmp.lt.s32.totalorder %s1345, 1
        %s1351 = scalar_select %p1350, %s1345, 1
        %s1352 = smul.addr %s1349, 2
        %s1353 = sadd.s32 %s1351, %s1352
        %s1354 = smul.addr %s1347, 64
        %s1355 = sadd.s32 %s1353, %s1354
        %s1356 = smul.addr %s1355, 8
        %s1357 = scalar_lea.vmem %s4, %s1356
      $region48: #{conv_block_forward.1} parent=43 // pred_fallthru
        _
    $region44: #{conv_block_forward.1} parent=5 // pred_fallthru
      _
  $region6: #{conv_block_forward.1} parent=0 // loop_footer
    %s14 = sadd.s32 1, %s10
  $region7: #{conv_block_forward.1} parent=0 // loop_footer_branch
    %9 = sbr.rel target = $region3
  $region8: #{conv_block_forward.1} parent=0 // loop_exit
    _

</llo_original>
